<compile_context>
chip_gen: v7x
topology: tpu7x:2x2x1
jax: 0.10.0
libtpu: 0.0.40
codegen_flags: <defaults>
</compile_context>

<pallas_src>
import functools
import math

import jax
import jax.numpy as jnp
from jax.experimental import pallas as pl
from jax.experimental.pallas import tpu as pltpu


def _layernorm_rowwise_kernel(x_ref, scale_ref, shift_ref, o_ref, *, inv_d, eps):
    # x_ref: (TILE_R, D); scale/shift: (1, D).  Two-pass stats, fused epilogue.
    x = x_ref[...].astype(jnp.float32)
    mean = jnp.sum(x, axis=-1, keepdims=True) * inv_d
    xc = x - mean
    var = jnp.sum(xc * xc, axis=-1, keepdims=True) * inv_d   # unbiased=False
    inv = jax.lax.rsqrt(var + eps)
    o_ref[...] = ((xc * inv) * scale_ref[...].astype(jnp.float32)
                  + shift_ref[...].astype(jnp.float32)).astype(o_ref.dtype)


def _layernorm_packed_kernel(x_ref, e_ref, et_ref, scale_ref, shift_ref, o_ref,
                             *, inv_d, eps):
    # x_ref: (TILE_P, KD) — k original rows packed side-by-side along lanes.
    # e_ref: (KD, K) segment matrix with E[j, j // D] = 1; et_ref = E^T.
    # x @ E gives per-group sums, (.) @ E^T broadcasts them back to each lane
    # of its group.  Four thin MXU matmuls total; everything stays lane-dense
    # (no reshapes, no masked stores).
    x = x_ref[...].astype(jnp.float32)
    e = e_ref[...]
    et = et_ref[...]
    mean = jnp.dot(jnp.dot(x, e, preferred_element_type=jnp.float32) * inv_d,
                   et, preferred_element_type=jnp.float32)           # (T, KD)
    xc = x - mean
    var_g = jnp.dot(xc * xc, e, preferred_element_type=jnp.float32) * inv_d  # (T, K)
    inv = jnp.dot(jax.lax.rsqrt(var_g + eps), et,
                  preferred_element_type=jnp.float32)                # (T, KD)
    o_ref[...] = ((xc * inv) * scale_ref[...].astype(jnp.float32)
                  + shift_ref[...].astype(jnp.float32)).astype(o_ref.dtype)


def _min_block_rows(dtype):
    bits = jnp.dtype(dtype).itemsize * 8
    if bits >= 32:
        return 8
    if bits == 16:
        return 16
    return 32


def _pick_tile_rows(rows, width, dtype, max_tile_rows=None,
                    target_block_bytes=4 << 20, min_grid_steps=4):
    """Largest row tile within ~target_block_bytes, budgeted at the f32-temp
    element size (so bf16/fp8 inputs account for their f32 intermediates),
    capped so the 1-D grid keeps >= min_grid_steps steps when possible, and
    sublane-aligned for the dtype."""
    budget_elem_bytes = max(jnp.dtype(dtype).itemsize, 4)
    align = _min_block_rows(dtype)
    t = max(1, target_block_bytes // (width * budget_elem_bytes))
    t = min(t, max(align, pl.cdiv(rows, min_grid_steps)))
    if max_tile_rows is not None:
        t = min(t, max_tile_rows)
    if t >= rows:
        return rows                       # full extent is always a legal block dim
    t = (t // align) * align if t >= align else align
    return min(t, rows)


def layer_norm(x, scale, shift, *, eps=1e-5, max_tile_rows=None):
    """LayerNorm over the last axis of x with per-feature scale/shift
    (matches torch: mean / var(unbiased=False) over dim=-1, eps=1e-5)."""
    orig_shape = x.shape
    D = orig_shape[-1]
    x2 = x.reshape(-1, D)
    R = x2.shape[0]

    cparams = pltpu.CompilerParams(
        dimension_semantics=("parallel",),
        vmem_limit_bytes=48 * 1024 * 1024,   # safe headroom under v7x's 64 MiB
    )

    def run_rowwise(rows_arr):
        r = rows_arr.shape[0]
        tile_rows = _pick_tile_rows(r, D, x.dtype, max_tile_rows)
        kernel = functools.partial(_layernorm_rowwise_kernel,
                                   inv_d=1.0 / D, eps=eps)
        return pl.pallas_call(
            kernel,
            out_shape=jax.ShapeDtypeStruct((r, D), x.dtype),
            grid_spec=pltpu.PrefetchScalarGridSpec(
                num_scalar_prefetch=0,
                grid=(pl.cdiv(r, tile_rows),),
                in_specs=[
                    pl.BlockSpec((tile_rows, D), lambda i: (i, 0)),
                    pl.BlockSpec((1, D), lambda i: (0, 0)),
                    pl.BlockSpec((1, D), lambda i: (0, 0)),
                ],
                out_specs=pl.BlockSpec((tile_rows, D), lambda i: (i, 0)),
            ),
            compiler_params=cparams,
        )(rows_arr, scale.reshape(1, D), shift.reshape(1, D))

    # Lane-packing factor: pack k rows so k*D is a multiple of 128 (lane-dense
    # loads, unmasked stores).  With factored-E stats the in-kernel MXU cost
    # scales with k, not k*D, so the coverage cap can be generous.
    k = 1
    if D % 128 != 0:
        kk = 128 // math.gcd(D, 128)
        if kk * D <= 1024 and R >= kk:
            k = kk

    if k == 1:
        # D already a multiple of 128, or packing not worthwhile / possible.
        return run_rowwise(x2).reshape(orig_shape)

    KD = k * D

    def run_packed(rows_arr):
        rp = rows_arr.shape[0] // k
        xk = rows_arr.reshape(rp, KD)                         # free reshape
        scale_p = jnp.tile(scale.reshape(-1), (k,)).reshape(1, KD)
        shift_p = jnp.tile(shift.reshape(-1), (k,)).reshape(1, KD)
        seg = jnp.arange(KD, dtype=jnp.int32) // D
        e = (seg[:, None] == jnp.arange(k, dtype=jnp.int32)[None, :]
             ).astype(jnp.float32)                            # (KD, K)
        et = jnp.transpose(e)                                 # (K, KD)
        tile_rows = _pick_tile_rows(rp, KD, x.dtype, max_tile_rows)
        kernel = functools.partial(_layernorm_packed_kernel,
                                   inv_d=1.0 / D, eps=eps)
        out_p = pl.pallas_call(
            kernel,
            out_shape=jax.ShapeDtypeStruct((rp, KD), x.dtype),
            grid_spec=pltpu.PrefetchScalarGridSpec(
                num_scalar_prefetch=0,
                grid=(pl.cdiv(rp, tile_rows),),
                in_specs=[
                    pl.BlockSpec((tile_rows, KD), lambda i: (i, 0)),
                    pl.BlockSpec((KD, k), lambda i: (0, 0)),
                    pl.BlockSpec((k, KD), lambda i: (0, 0)),
                    pl.BlockSpec((1, KD), lambda i: (0, 0)),
                    pl.BlockSpec((1, KD), lambda i: (0, 0)),
                ],
                out_specs=pl.BlockSpec((tile_rows, KD), lambda i: (i, 0)),
            ),
            compiler_params=cparams,
        )(xk, e, et, scale_p, shift_p)
        return out_p.reshape(rp * k, D)

    R_main = (R // k) * k
    if R_main == R:
        out = run_packed(x2)
    else:
        # Pack the bulk; only the < k leftover rows take the rowwise path.
        out = jnp.concatenate(
            [run_packed(x2[:R_main]), run_rowwise(x2[R_main:])], axis=0)
    return out.reshape(orig_shape)


def _reference(x, scale, shift, eps=1e-5):
    mean = jnp.mean(x, axis=-1, keepdims=True)
    var = jnp.mean((x - mean) ** 2, axis=-1, keepdims=True)
    return scale * ((x - mean) / jnp.sqrt(var + eps)) + shift


if __name__ == "__main__":
    key = jax.random.PRNGKey(0)
    k1, k2, k3, k4, k5 = jax.random.split(key, 5)

    batch, seq, emb_dim = 2, 8, 32
    x = jax.random.normal(k1, (batch, seq, emb_dim), dtype=jnp.float32)
    scale = 1.0 + 0.1 * jax.random.normal(k2, (emb_dim,), dtype=jnp.float32)
    shift = 0.1 * jax.random.normal(k3, (emb_dim,), dtype=jnp.float32)

    # 1) Main path: lane-packed (k=4 -> 128-lane-dense blocks, factored E).
    y = jax.block_until_ready(layer_norm(x, scale, shift))
    assert jnp.allclose(y, _reference(x, scale, shift), atol=1e-4, rtol=1e-4), \
        "mismatch vs reference (packed path)"

    # 2) Row count not divisible by k: packed bulk + rowwise remainder rows.
    x2 = jax.random.normal(jax.random.PRNGKey(1), (2, 9, emb_dim), dtype=jnp.float32)
    y2 = jax.block_until_ready(layer_norm(x2, scale, shift, max_tile_rows=8))
    assert jnp.allclose(y2, _reference(x2, scale, shift), atol=1e-4, rtol=1e-4), \
        "mismatch vs reference (packed bulk + rowwise remainder)"

    # 3) D multiple of 128: pure rowwise path with a multi-step grid.
    D3 = 256
    x3 = jax.random.normal(k4, (3, 40, D3), dtype=jnp.float32)
    scale3 = 1.0 + 0.1 * jax.random.normal(k5, (D3,), dtype=jnp.float32)
    shift3 = jnp.zeros((D3,), dtype=jnp.float32)
    y3 = jax.block_until_ready(layer_norm(x3, scale3, shift3))
    assert jnp.allclose(y3, _reference(x3, scale3, shift3), atol=1e-4, rtol=1e-4), \
        "mismatch vs reference (rowwise / large-D path)"

    # 4) bf16 input, D=160 (not a multiple of 128, KD=640): packed path with
    #    f32 intermediates; tolerance covers the final bf16 cast only.
    D4 = 160
    x4 = jax.random.normal(jax.random.PRNGKey(2), (4, 64, D4), dtype=jnp.bfloat16)
    scale4 = jnp.ones((D4,), dtype=jnp.float32)
    shift4 = jnp.zeros((D4,), dtype=jnp.float32)
    y4 = jax.block_until_ready(layer_norm(x4, scale4, shift4))
    ref4 = _reference(x4.astype(jnp.float32), scale4, shift4)
    assert jnp.allclose(y4.astype(jnp.float32), ref4, atol=1e-1, rtol=5e-2), \
        "mismatch vs reference (bf16 packed path)"

    print("KERNEL_OK")
</pallas_src>

<mosaic_0001>
module attributes {stable_mosaic.version = 11 : i64} {
  func.func @_layernorm_packed_kernel(%arg0: i32, %arg1: memref<4x128xf32, #tpu.memory_space<vmem>>, %arg2: memref<128x4xf32, #tpu.memory_space<vmem>>, %arg3: memref<4x128xf32, #tpu.memory_space<vmem>>, %arg4: memref<1x128xf32, #tpu.memory_space<vmem>>, %arg5: memref<1x128xf32, #tpu.memory_space<vmem>>, %arg6: memref<4x128xf32, #tpu.memory_space<vmem>>) attributes {dimension_semantics = [#tpu.dimension_semantics<parallel>], iteration_bounds = array<i64: 1>, scalar_prefetch = 0 : i64, scratch_operands = 0 : i64, tpu.core_type = #tpu.core_type<tc>, window_params = [{transform_indices = @transform_0, window_bounds = array<i64: 4, 128>}, {pipeline_mode = #tpu.pipeline_mode<synchronous>, transform_indices = @transform_1, window_bounds = array<i64: 128, 4>}, {pipeline_mode = #tpu.pipeline_mode<synchronous>, transform_indices = @transform_2, window_bounds = array<i64: 4, 128>}, {pipeline_mode = #tpu.pipeline_mode<synchronous>, transform_indices = @transform_3, window_bounds = array<i64: 1, 128>}, {pipeline_mode = #tpu.pipeline_mode<synchronous>, transform_indices = @transform_4, window_bounds = array<i64: 1, 128>}, {transform_indices = @transform_5, window_bounds = array<i64: 4, 128>}]} {
    %c0 = arith.constant 0 : index
    %c0_0 = arith.constant 0 : index
    %0 = vector.load %arg1[%c0, %c0_0] : memref<4x128xf32, #tpu.memory_space<vmem>>, vector<4x128xf32>
    %c0_1 = arith.constant 0 : index
    %c0_2 = arith.constant 0 : index
    %1 = vector.load %arg2[%c0_1, %c0_2] : memref<128x4xf32, #tpu.memory_space<vmem>>, vector<128x4xf32>
    %c0_3 = arith.constant 0 : index
    %c0_4 = arith.constant 0 : index
    %2 = vector.load %arg3[%c0_3, %c0_4] : memref<4x128xf32, #tpu.memory_space<vmem>>, vector<4x128xf32>
    %cst = arith.constant dense<0.000000e+00> : vector<4x4xf32>
    %3 = tpu.matmul %0, %1, %cst {dimension_numbers = #tpu.dot_dimension_numbers<[1], [0], [0], [1], [0, 0, 1, 1], [], []>} : vector<4x128xf32>, vector<128x4xf32>, vector<4x4xf32> -> vector<4x4xf32>
    %cst_5 = arith.constant 3.125000e-02 : f32
    %4 = vector.broadcast %cst_5 : f32 to vector<4x4xf32>
    %5 = arith.mulf %3, %4 : vector<4x4xf32>
    %cst_6 = arith.constant dense<0.000000e+00> : vector<4x128xf32>
    %6 = tpu.matmul %5, %2, %cst_6 {dimension_numbers = #tpu.dot_dimension_numbers<[1], [0], [0], [1], [0, 0, 1, 1], [], []>} : vector<4x4xf32>, vector<4x128xf32>, vector<4x128xf32> -> vector<4x128xf32>
    %7 = arith.subf %0, %6 : vector<4x128xf32>
    %8 = arith.mulf %7, %7 : vector<4x128xf32>
    %cst_7 = arith.constant dense<0.000000e+00> : vector<4x4xf32>
    %9 = tpu.matmul %8, %1, %cst_7 {dimension_numbers = #tpu.dot_dimension_numbers<[1], [0], [0], [1], [0, 0, 1, 1], [], []>} : vector<4x128xf32>, vector<128x4xf32>, vector<4x4xf32> -> vector<4x4xf32>
    %cst_8 = arith.constant 3.125000e-02 : f32
    %10 = vector.broadcast %cst_8 : f32 to vector<4x4xf32>
    %11 = arith.mulf %9, %10 : vector<4x4xf32>
    %cst_9 = arith.constant 9.99999974E-6 : f32
    %12 = vector.broadcast %cst_9 : f32 to vector<4x4xf32>
    %13 = arith.addf %11, %12 : vector<4x4xf32>
    %14 = math.rsqrt %13 : vector<4x4xf32>
    %cst_10 = arith.constant dense<0.000000e+00> : vector<4x128xf32>
    %15 = tpu.matmul %14, %2, %cst_10 {dimension_numbers = #tpu.dot_dimension_numbers<[1], [0], [0], [1], [0, 0, 1, 1], [], []>} : vector<4x4xf32>, vector<4x128xf32>, vector<4x128xf32> -> vector<4x128xf32>
    %16 = arith.mulf %7, %15 : vector<4x128xf32>
    %c0_11 = arith.constant 0 : index
    %c0_12 = arith.constant 0 : index
    %17 = vector.load %arg4[%c0_11, %c0_12] : memref<1x128xf32, #tpu.memory_space<vmem>>, vector<1x128xf32>
    %18 = vector.broadcast %17 : vector<1x128xf32> to vector<4x128xf32>
    %19 = arith.mulf %16, %18 : vector<4x128xf32>
    %c0_13 = arith.constant 0 : index
    %c0_14 = arith.constant 0 : index
    %20 = vector.load %arg5[%c0_13, %c0_14] : memref<1x128xf32, #tpu.memory_space<vmem>>, vector<1x128xf32>
    %21 = vector.broadcast %20 : vector<1x128xf32> to vector<4x128xf32>
    %22 = arith.addf %19, %21 : vector<4x128xf32>
    %c0_15 = arith.constant 0 : index
    %c0_16 = arith.constant 0 : index
    %23 = vector.load %arg6[%c0_15, %c0_16] : memref<4x128xf32, #tpu.memory_space<vmem>>, vector<4x128xf32>
    tpu.vector_store %arg6[%c0_15, %c0_16], %22 {strides = array<i32>} : memref<4x128xf32, #tpu.memory_space<vmem>>, vector<4x128xf32>,
    return
  }
  func.func @transform_0(%arg0: i32) -> (i32, i32) {
    %c0_i32 = arith.constant 0 : i32
    %c0_i32_0 = arith.constant 0 : i32
    return %arg0, %c0_i32 : i32, i32
  }
  func.func @transform_1(%arg0: i32) -> (i32, i32) {
    %c0_i32 = arith.constant 0 : i32
    %c0_i32_0 = arith.constant 0 : i32
    %c0_i32_1 = arith.constant 0 : i32
    return %c0_i32, %c0_i32_0 : i32, i32
  }
  func.func @transform_2(%arg0: i32) -> (i32, i32) {
    %c0_i32 = arith.constant 0 : i32
    %c0_i32_0 = arith.constant 0 : i32
    %c0_i32_1 = arith.constant 0 : i32
    return %c0_i32, %c0_i32_0 : i32, i32
  }
  func.func @transform_3(%arg0: i32) -> (i32, i32) {
    %c0_i32 = arith.constant 0 : i32
    %c0_i32_0 = arith.constant 0 : i32
    %c0_i32_1 = arith.constant 0 : i32
    return %c0_i32, %c0_i32_0 : i32, i32
  }
  func.func @transform_4(%arg0: i32) -> (i32, i32) {
    %c0_i32 = arith.constant 0 : i32
    %c0_i32_0 = arith.constant 0 : i32
    %c0_i32_1 = arith.constant 0 : i32
    return %c0_i32, %c0_i32_0 : i32, i32
  }
  func.func @transform_5(%arg0: i32) -> (i32, i32) {
    %c0_i32 = arith.constant 0 : i32
    %c0_i32_0 = arith.constant 0 : i32
    return %arg0, %c0_i32 : i32, i32
  }
}

</mosaic_0001>

<llo_original>
// kernel: tpu_custom_call.1
$region0: #{tpu_custom_call.1}
  #allocation0 [shape = 'u32[]', space=smem, size = 0x4, offset = 0x4, fixed_abs, tag = 'smem constant byte address 0x4 - core index']
  #allocation1 [shape = 'u32[144,128]{1,0:T(1,128)}', space=vmem, size = 0x12000, scoped, tag = 'internal scratch']
  %s0 = inlined_call_operand.vmem [shape: f32[4,128], index: 0, kind: input, shape index: {}]
  %s1 = inlined_call_operand.vmem [shape: f32[128,4], index: 1, kind: input, shape index: {}]
  %s2 = inlined_call_operand.vmem [shape: f32[4,128], index: 2, kind: input, shape index: {}]
  %s3 = inlined_call_operand.vmem [shape: f32[1,128], index: 3, kind: input, shape index: {}]
  %s4 = inlined_call_operand.vmem [shape: f32[1,128], index: 4, kind: input, shape index: {}]
  %s5 = inlined_call_operand.hbm [shape: f32[4,128], index: 5, kind: output, shape index: {}]
  %s6 = sld [smem:[#allocation0]]
  $region30: #{tpu_custom_call.1} parent=0
    _
  %s8 = ssub.s32 1, %s6
  %s9 = scalar_select 0, %s8, %s6
  $region1: #{tpu_custom_call.1} parent=0
    #allocation2 [shape = 'u8[2048]{0}', space=vmem, size = 0x800, scoped, tag = 'output window, operand 0, single buffered']
    #allocation3 [shape = 's32[1]{0}', space=sflag, size = 0x4, scoped, tag = 'scoped memory for tpu_custom_call.1']
    %10 = vsyncpa [#allocation3], 0
    // Predicated region
    $region2: #{tpu_custom_call.1} parent=1 // pred_check
      _
    $region3: #{tpu_custom_call.1} parent=1 // pred_check_branch
      %12 = sbr.rel (0) target = $region5
    $region4: #{tpu_custom_call.1} parent=1 // pred_region
      _
    $region5: #{tpu_custom_call.1} parent=1 // pred_fallthru
      _
    // Predicated region
    $region6: #{tpu_custom_call.1} parent=1 // pred_check
      _
    $region7: #{tpu_custom_call.1} parent=1 // pred_check_branch
      %14 = sbr.rel (0) target = $region9
    $region8: #{tpu_custom_call.1} parent=1 // pred_region
      _
    $region9: #{tpu_custom_call.1} parent=1 // pred_fallthru
      _
    // Predicated region
    $region10: #{tpu_custom_call.1} parent=1 // pred_check
      _
    $region11: #{tpu_custom_call.1} parent=1 // pred_check_branch
      %16 = sbr.rel (0) target = $region13
    $region12: #{tpu_custom_call.1} parent=1 // pred_region
      _
    $region13: #{tpu_custom_call.1} parent=1 // pred_fallthru
      _
    // Predicated region
    $region14: #{tpu_custom_call.1} parent=1 // pred_check
      _
    $region15: #{tpu_custom_call.1} parent=1 // pred_check_branch
      %18 = sbr.rel (0) target = $region17
    $region16: #{tpu_custom_call.1} parent=1 // pred_region
      _
    $region17: #{tpu_custom_call.1} parent=1 // pred_fallthru
      _
    // Predicated region
    $region18: #{tpu_custom_call.1} parent=1 // pred_check
      _
    $region19: #{tpu_custom_call.1} parent=1 // pred_check_branch
      %20 = sbr.rel (0) target = $region21
    $region20: #{tpu_custom_call.1} parent=1 // pred_region
      _
    $region21: #{tpu_custom_call.1} parent=1 // pred_fallthru
      _
    %v21 = vld [vmem:[%s0] sm:$0xf]
    %v22 = vld [vmem:[%s1] sm:$0xff]
    %v23 = vld [vmem:[%s1 + $0x8] sm:$0xff]
    %v24 = vld [vmem:[%s1 + $0x10] sm:$0xff]
    %v25 = vld [vmem:[%s1 + $0x18] sm:$0xff]
    %v26 = vld [vmem:[%s1 + $0x20] sm:$0xff]
    %v27 = vld [vmem:[%s1 + $0x28] sm:$0xff]
    %v28 = vld [vmem:[%s1 + $0x30] sm:$0xff]
    %v29 = vld [vmem:[%s1 + $0x38] sm:$0xff]
    %v30 = vld [vmem:[%s1 + $0x40] sm:$0xff]
    %v31 = vld [vmem:[%s1 + $0x48] sm:$0xff]
    %v32 = vld [vmem:[%s1 + $0x50] sm:$0xff]
    %v33 = vld [vmem:[%s1 + $0x58] sm:$0xff]
    %v34 = vld [vmem:[%s1 + $0x60] sm:$0xff]
    %v35 = vld [vmem:[%s1 + $0x68] sm:$0xff]
    %v36 = vld [vmem:[%s1 + $0x70] sm:$0xff]
    %v37 = vld [vmem:[%s1 + $0x78] sm:$0xff]
    %v38 = vld [vmem:[%s2] sm:$0xf]
    %39 = vmatprep.subr.mxu0 0.0
    %40 = vmatpush1.msra.mxu0 %v22
    %41 = vmatprep.subr.mxu0 0.0
    %42 = vmatpush1.msra.mxu0 %v23
    %43 = vmatprep.subr.mxu0 0.0
    %44 = vmatpush1.msra.mxu0 %v24
    %45 = vmatprep.subr.mxu0 0.0
    %46 = vmatpush1.msra.mxu0 %v25
    %47 = vmatprep.subr.mxu0 0.0
    %48 = vmatpush1.msra.mxu0 %v26
    %49 = vmatprep.subr.mxu0 0.0
    %50 = vmatpush1.msra.mxu0 %v27
    %51 = vmatprep.subr.mxu0 0.0
    %52 = vmatpush1.msra.mxu0 %v28
    %53 = vmatprep.subr.mxu0 0.0
    %54 = vmatpush1.msra.mxu0 %v29
    %55 = vmatprep.subr.mxu0 0.0
    %56 = vmatpush1.msra.mxu0 %v30
    %57 = vmatprep.subr.mxu0 0.0
    %58 = vmatpush1.msra.mxu0 %v31
    %59 = vmatprep.subr.mxu0 0.0
    %60 = vmatpush1.msra.mxu0 %v32
    %61 = vmatprep.subr.mxu0 0.0
    %62 = vmatpush1.msra.mxu0 %v33
    %63 = vmatprep.subr.mxu0 0.0
    %64 = vmatpush1.msra.mxu0 %v34
    %65 = vmatprep.subr.mxu0 0.0
    %66 = vmatpush1.msra.mxu0 %v35
    %67 = vmatprep.subr.mxu0 0.0
    %68 = vmatpush1.msra.mxu0 %v36
    %69 = vmatprep.subr.mxu0 0.0
    %70 = vmatpush1.msra.mxu0 %v37
    %71 = vmatprep.subr.mxu0 0.0
    %72 = vmatpush1.msra.mxu0 0.0
    %73 = vmatprep.subr.mxu0 0.0
    %74 = vmatpush1.msra.mxu0 0.0
    %75 = vmatprep.subr.mxu0 0.0
    %76 = vmatpush1.msra.mxu0 0.0
    %77 = vmatprep.subr.mxu0 0.0
    %78 = vmatpush1.msra.mxu0 0.0
    %79 = vmatprep.subr.mxu0 0.0
    %80 = vmatpush1.msra.mxu0 0.0
    %81 = vmatprep.subr.mxu0 0.0
    %82 = vmatpush1.msra.mxu0 0.0
    %83 = vmatprep.subr.mxu0 0.0
    %84 = vmatpush1.msra.mxu0 0.0
    %85 = vmatprep.subr.mxu0 0.0
    %86 = vmatpush1.msra.mxu0 0.0
    %87 = vmatprep.subr.mxu0 0.0
    %88 = vmatpush1.msra.mxu0 0.0
    %89 = vmatprep.subr.mxu0 0.0
    %90 = vmatpush1.msra.mxu0 0.0
    %91 = vmatprep.subr.mxu0 0.0
    %92 = vmatpush1.msra.mxu0 0.0
    %93 = vmatprep.subr.mxu0 0.0
    %94 = vmatpush1.msra.mxu0 0.0
    %95 = vmatprep.subr.mxu0 0.0
    %96 = vmatpush1.msra.mxu0 0.0
    %97 = vmatprep.subr.mxu0 0.0
    %98 = vmatpush1.msra.mxu0 0.0
    %99 = vmatprep.subr.mxu0 0.0
    %100 = vmatpush1.msra.mxu0 0.0
    %101 = vmatprep.subr.mxu0 0.0
    %102 = vmatpush1.msra.mxu0 0.0
    %103 = vmatprep.mubr.f32.mxu0 0.0
    %104 = vmatmul.mubr.f32.gmra.mrb[0].mxu0 %v21
    %v105 = vpop.f32.mrb[0].mxu0
    %v106 = vadd.f32 0.0, %v105
    %v107 = vpop.f32.mrb[0].mxu0
    %108 = vdwg.mxu0
    %v109 = vmul.f32 %v106, 0.03125
    %vm110 = vcmask 31744
    %v112 = vsel %vm110, %v109, 0
    %vm114 = vcmask 1043456
    %v116 = vsel %vm114, %v38, 0
    %118 = vmatprep.subr.mxu0 0.0
    %119 = vmatpush1.msra.mxu0 %v116
    %120 = vmatprep.subr.mxu0 0.0
    %121 = vmatpush1.msra.mxu0 0.0
    %122 = vmatprep.subr.mxu0 0.0
    %123 = vmatpush1.msra.mxu0 0.0
    %124 = vmatprep.subr.mxu0 0.0
    %125 = vmatpush1.msra.mxu0 0.0
    %126 = vmatprep.subr.mxu0 0.0
    %127 = vmatpush1.msra.mxu0 0.0
    %128 = vmatprep.subr.mxu0 0.0
    %129 = vmatpush1.msra.mxu0 0.0
    %130 = vmatprep.subr.mxu0 0.0
    %131 = vmatpush1.msra.mxu0 0.0
    %132 = vmatprep.subr.mxu0 0.0
    %133 = vmatpush1.msra.mxu0 0.0
    %134 = vmatprep.subr.mxu0 0.0
    %135 = vmatpush1.msra.mxu0 0.0
    %136 = vmatprep.subr.mxu0 0.0
    %137 = vmatpush1.msra.mxu0 0.0
    %138 = vmatprep.subr.mxu0 0.0
    %139 = vmatpush1.msra.mxu0 0.0
    %140 = vmatprep.subr.mxu0 0.0
    %141 = vmatpush1.msra.mxu0 0.0
    %142 = vmatprep.subr.mxu0 0.0
    %143 = vmatpush1.msra.mxu0 0.0
    %144 = vmatprep.subr.mxu0 0.0
    %145 = vmatpush1.msra.mxu0 0.0
    %146 = vmatprep.subr.mxu0 0.0
    %147 = vmatpush1.msra.mxu0 0.0
    %148 = vmatprep.subr.mxu0 0.0
    %149 = vmatpush1.msra.mxu0 0.0
    %150 = vmatprep.subr.mxu0 0.0
    %151 = vmatpush1.msra.mxu0 0.0
    %152 = vmatprep.subr.mxu0 0.0
    %153 = vmatpush1.msra.mxu0 0.0
    %154 = vmatprep.subr.mxu0 0.0
    %155 = vmatpush1.msra.mxu0 0.0
    %156 = vmatprep.subr.mxu0 0.0
    %157 = vmatpush1.msra.mxu0 0.0
    %158 = vmatprep.subr.mxu0 0.0
    %159 = vmatpush1.msra.mxu0 0.0
    %160 = vmatprep.subr.mxu0 0.0
    %161 = vmatpush1.msra.mxu0 0.0
    %162 = vmatprep.subr.mxu0 0.0
    %163 = vmatpush1.msra.mxu0 0.0
    %164 = vmatprep.subr.mxu0 0.0
    %165 = vmatpush1.msra.mxu0 0.0
    %166 = vmatprep.subr.mxu0 0.0
    %167 = vmatpush1.msra.mxu0 0.0
    %168 = vmatprep.subr.mxu0 0.0
    %169 = vmatpush1.msra.mxu0 0.0
    %170 = vmatprep.subr.mxu0 0.0
    %171 = vmatpush1.msra.mxu0 0.0
    %172 = vmatprep.subr.mxu0 0.0
    %173 = vmatpush1.msra.mxu0 0.0
    %174 = vmatprep.subr.mxu0 0.0
    %175 = vmatpush1.msra.mxu0 0.0
    %176 = vmatprep.subr.mxu0 0.0
    %177 = vmatpush1.msra.mxu0 0.0
    %178 = vmatprep.subr.mxu0 0.0
    %179 = vmatpush1.msra.mxu0 0.0
    %180 = vmatprep.subr.mxu0 0.0
    %181 = vmatpush1.msra.mxu0 0.0
    %182 = vmatprep.mubr.f32.mxu0 0.0
    %183 = vmatmul.mubr.f32.gmra.mrb[0].mxu0 %v112
    %v184 = vpop.f32.mrb[0].mxu0
    %v185 = vadd.f32 0.0, %v184
    %v186 = vpop.f32.mrb[0].mxu0
    %187 = vdwg.mxu0
    %v188 = vsub.f32 %v21, %v185
    %v189 = vmul.f32 %v188, %v188
    %190 = vmatprep.subr.mxu0 0.0
    %191 = vmatpush1.msra.mxu0 %v22
    %192 = vmatprep.subr.mxu0 0.0
    %193 = vmatpush1.msra.mxu0 %v23
    %194 = vmatprep.subr.mxu0 0.0
    %195 = vmatpush1.msra.mxu0 %v24
    %196 = vmatprep.subr.mxu0 0.0
    %197 = vmatpush1.msra.mxu0 %v25
    %198 = vmatprep.subr.mxu0 0.0
    %199 = vmatpush1.msra.mxu0 %v26
    %200 = vmatprep.subr.mxu0 0.0
    %201 = vmatpush1.msra.mxu0 %v27
    %202 = vmatprep.subr.mxu0 0.0
    %203 = vmatpush1.msra.mxu0 %v28
    %204 = vmatprep.subr.mxu0 0.0
    %205 = vmatpush1.msra.mxu0 %v29
    %206 = vmatprep.subr.mxu0 0.0
    %207 = vmatpush1.msra.mxu0 %v30
    %208 = vmatprep.subr.mxu0 0.0
    %209 = vmatpush1.msra.mxu0 %v31
    %210 = vmatprep.subr.mxu0 0.0
    %211 = vmatpush1.msra.mxu0 %v32
    %212 = vmatprep.subr.mxu0 0.0
    %213 = vmatpush1.msra.mxu0 %v33
    %214 = vmatprep.subr.mxu0 0.0
    %215 = vmatpush1.msra.mxu0 %v34
    %216 = vmatprep.subr.mxu0 0.0
    %217 = vmatpush1.msra.mxu0 %v35
    %218 = vmatprep.subr.mxu0 0.0
    %219 = vmatpush1.msra.mxu0 %v36
    %220 = vmatprep.subr.mxu0 0.0
    %221 = vmatpush1.msra.mxu0 %v37
    %222 = vmatprep.subr.mxu0 0.0
    %223 = vmatpush1.msra.mxu0 0.0
    %224 = vmatprep.subr.mxu0 0.0
    %225 = vmatpush1.msra.mxu0 0.0
    %226 = vmatprep.subr.mxu0 0.0
    %227 = vmatpush1.msra.mxu0 0.0
    %228 = vmatprep.subr.mxu0 0.0
    %229 = vmatpush1.msra.mxu0 0.0
    %230 = vmatprep.subr.mxu0 0.0
    %231 = vmatpush1.msra.mxu0 0.0
    %232 = vmatprep.subr.mxu0 0.0
    %233 = vmatpush1.msra.mxu0 0.0
    %234 = vmatprep.subr.mxu0 0.0
    %235 = vmatpush1.msra.mxu0 0.0
    %236 = vmatprep.subr.mxu0 0.0
    %237 = vmatpush1.msra.mxu0 0.0
    %238 = vmatprep.subr.mxu0 0.0
    %239 = vmatpush1.msra.mxu0 0.0
    %240 = vmatprep.subr.mxu0 0.0
    %241 = vmatpush1.msra.mxu0 0.0
    %242 = vmatprep.subr.mxu0 0.0
    %243 = vmatpush1.msra.mxu0 0.0
    %244 = vmatprep.subr.mxu0 0.0
    %245 = vmatpush1.msra.mxu0 0.0
    %246 = vmatprep.subr.mxu0 0.0
    %247 = vmatpush1.msra.mxu0 0.0
    %248 = vmatprep.subr.mxu0 0.0
    %249 = vmatpush1.msra.mxu0 0.0
    %250 = vmatprep.subr.mxu0 0.0
    %251 = vmatpush1.msra.mxu0 0.0
    %252 = vmatprep.subr.mxu0 0.0
    %253 = vmatpush1.msra.mxu0 0.0
    %254 = vmatprep.mubr.f32.mxu0 0.0
    %255 = vmatmul.mubr.f32.gmra.mrb[0].mxu0 %v189
    %v256 = vpop.f32.mrb[0].mxu0
    %v257 = vadd.f32 0.0, %v256
    %v258 = vpop.f32.mrb[0].mxu0
    %259 = vdwg.mxu0
    %v260 = vmul.f32 %v257, 0.03125
    %v261 = vadd.f32 %v260, 1e-05
    %v262 = vrsqrt.pop %v261
    %v264 = vsel %vm110, %v262, 0
    %266 = vmatprep.subr.mxu0 0.0
    %267 = vmatpush1.msra.mxu0 %v116
    %268 = vmatprep.subr.mxu0 0.0
    %269 = vmatpush1.msra.mxu0 0.0
    %270 = vmatprep.subr.mxu0 0.0
    %271 = vmatpush1.msra.mxu0 0.0
    %272 = vmatprep.subr.mxu0 0.0
    %273 = vmatpush1.msra.mxu0 0.0
    %274 = vmatprep.subr.mxu0 0.0
    %275 = vmatpush1.msra.mxu0 0.0
    %276 = vmatprep.subr.mxu0 0.0
    %277 = vmatpush1.msra.mxu0 0.0
    %278 = vmatprep.subr.mxu0 0.0
    %279 = vmatpush1.msra.mxu0 0.0
    %280 = vmatprep.subr.mxu0 0.0
    %281 = vmatpush1.msra.mxu0 0.0
    %282 = vmatprep.subr.mxu0 0.0
    %283 = vmatpush1.msra.mxu0 0.0
    %284 = vmatprep.subr.mxu0 0.0
    %285 = vmatpush1.msra.mxu0 0.0
    %286 = vmatprep.subr.mxu0 0.0
    %287 = vmatpush1.msra.mxu0 0.0
    %288 = vmatprep.subr.mxu0 0.0
    %289 = vmatpush1.msra.mxu0 0.0
    %290 = vmatprep.subr.mxu0 0.0
    %291 = vmatpush1.msra.mxu0 0.0
    %292 = vmatprep.subr.mxu0 0.0
    %293 = vmatpush1.msra.mxu0 0.0
    %294 = vmatprep.subr.mxu0 0.0
    %295 = vmatpush1.msra.mxu0 0.0
    %296 = vmatprep.subr.mxu0 0.0
    %297 = vmatpush1.msra.mxu0 0.0
    %298 = vmatprep.subr.mxu0 0.0
    %299 = vmatpush1.msra.mxu0 0.0
    %300 = vmatprep.subr.mxu0 0.0
    %301 = vmatpush1.msra.mxu0 0.0
    %302 = vmatprep.subr.mxu0 0.0
    %303 = vmatpush1.msra.mxu0 0.0
    %304 = vmatprep.subr.mxu0 0.0
    %305 = vmatpush1.msra.mxu0 0.0
    %306 = vmatprep.subr.mxu0 0.0
    %307 = vmatpush1.msra.mxu0 0.0
    %308 = vmatprep.subr.mxu0 0.0
    %309 = vmatpush1.msra.mxu0 0.0
    %310 = vmatprep.subr.mxu0 0.0
    %311 = vmatpush1.msra.mxu0 0.0
    %312 = vmatprep.subr.mxu0 0.0
    %313 = vmatpush1.msra.mxu0 0.0
    %314 = vmatprep.subr.mxu0 0.0
    %315 = vmatpush1.msra.mxu0 0.0
    %316 = vmatprep.subr.mxu0 0.0
    %317 = vmatpush1.msra.mxu0 0.0
    %318 = vmatprep.subr.mxu0 0.0
    %319 = vmatpush1.msra.mxu0 0.0
    %320 = vmatprep.subr.mxu0 0.0
    %321 = vmatpush1.msra.mxu0 0.0
    %322 = vmatprep.subr.mxu0 0.0
    %323 = vmatpush1.msra.mxu0 0.0
    %324 = vmatprep.subr.mxu0 0.0
    %325 = vmatpush1.msra.mxu0 0.0
    %326 = vmatprep.subr.mxu0 0.0
    %327 = vmatpush1.msra.mxu0 0.0
    %328 = vmatprep.subr.mxu0 0.0
    %329 = vmatpush1.msra.mxu0 0.0
    %330 = vmatprep.mubr.f32.mxu0 0.0
    %331 = vmatmul.mubr.f32.gmra.mrb[0].mxu0 %v264
    %v332 = vpop.f32.mrb[0].mxu0
    %v333 = vadd.f32 0.0, %v332
    %v334 = vpop.f32.mrb[0].mxu0
    %335 = vdwg.mxu0
    %v336 = vmul.f32 %v188, %v333
    %v337 = vld [vmem:[%s3] sm:$0x1]
    %v339 = vlaneseq
    %v340 = vshrl.u32 %v339, 7
    %v341 = vsub.s32 0, %v340
    %v342 = vrot.slane %v337, %v341
    %v344 = vmul.f32 %v336, %v342
    %v345 = vld [vmem:[%s4] sm:$0x1]
    %v347 = vlaneseq
    %v348 = vshrl.u32 %v347, 7
    %v349 = vsub.s32 0, %v348
    %v350 = vrot.slane %v345, %v349
    %v352 = vadd.f32 %v344, %v350
    %353 = vst [vmem:[#allocation2] sm:$0xf] %v352
    // Predicated region
    $region22: #{tpu_custom_call.1} parent=1 // pred_check
      _
    $region23: #{tpu_custom_call.1} parent=1 // pred_check_branch
      %355 = sbr.rel (0) target = $region25
    $region24: #{tpu_custom_call.1} parent=1 // pred_region
      %s357 = ssub.s32 64, 64
      %358 = vsyncadd [#allocation3], %s357
      %s360 = sshll.u32 [#allocation2], 4
      %s361 = int_to_ptr.vmem [resolvable:$true] %s360
      %363 = dma.vmem_to_hbm [thread:$0]  %s361, 64, %s5, [#allocation3]
    $region25: #{tpu_custom_call.1} parent=1 // pred_fallthru
      _
    // Predicated region
    $region26: #{tpu_custom_call.1} parent=1 // pred_check
      _
    $region27: #{tpu_custom_call.1} parent=1 // pred_check_branch
      %365 = sbr.rel (0) target = $region29
    $region28: #{tpu_custom_call.1} parent=1 // pred_region
      %366 = dma.done [#allocation3], 64
    $region29: #{tpu_custom_call.1} parent=1 // pred_fallthru
      _
    %367 = vsyncpa [#allocation3], 1

</llo_original>
